<compile_context>
chip_gen: v5e
topology: v5e:2x2
jax: 0.10.0
libtpu: 0.0.40
codegen_flags: <defaults>
</compile_context>

<pallas_src>
import functools

import jax
import jax.numpy as jnp
from jax.experimental import pallas as pl
from jax.experimental.pallas import tpu as pltpu


def _adaptive_gaussian_kernel(x_ref, halo_ref, sigma_ref, out_ref, xp_ref, *, filter_size):
    p = filter_size // 2
    C, th, W = x_ref.shape

    # ---- per-pixel weights: one exp + integer powers, shared across channels ----
    s = sigma_ref[...].astype(jnp.float32)                  # (SC, th, W)
    e = jnp.exp(s * s * (-0.5))                              # the only EUP exp per pixel

    d2_counts = {}
    for r in range(filter_size):
        for c in range(filter_size):
            d2 = (r - p) ** 2 + (c - p) ** 2
            d2_counts[d2] = d2_counts.get(d2, 0) + 1

    powers = {1: e}

    def epow(k):                                             # e**k via memoized VPU muls
        if k not in powers:
            half = k // 2
            powers[k] = epow(half) * epow(k - half)
        return powers[k]

    # normalizer from tap multiplicities (center weight is exactly 1)
    den = jnp.full(e.shape, float(d2_counts[0]), jnp.float32)
    for d2 in sorted(d2_counts):
        if d2 == 0:
            continue
        den = den + float(d2_counts[d2]) * epow(d2)
    # EUP divide, off the VALU critical path (approx=False keeps the 1e-5 tolerance).
    inv_den = pl.reciprocal(den, approx=False)

    # ---- fused reflection pad: assemble the padded tile in VMEM scratch ----
    xp_ref[:, p:p + th, p:p + W] = x_ref[...].astype(jnp.float32)
    xp_ref[:, :p, p:p + W] = halo_ref[:, :p, :].astype(jnp.float32)
    xp_ref[:, p + th:, p:p + W] = halo_ref[:, p:, :].astype(jnp.float32)
    for j in range(p):
        # left padded col (p-1-j) mirrors center col (p+1+j); right mirrors symmetrically
        xp_ref[:, :, p - 1 - j:p - j] = xp_ref[:, :, p + 1 + j:p + 2 + j]
        xp_ref[:, :, p + W + j:p + W + j + 1] = xp_ref[:, :, p + W - 2 - j:p + W - 1 - j]

    # ---- 2-D stencil: hoist column (lane) shifts; group taps by d2 ----
    xcols = [xp_ref[:, :, c:c + W] for c in range(filter_size)]   # f lane-realigned views

    groups = {}
    for r in range(filter_size):
        for c in range(filter_size):
            d2 = (r - p) ** 2 + (c - p) ** 2
            groups.setdefault(d2, []).append((r, c))

    # TODO(synk): for filter_size >= 7 switch to lax.fori_loop(unroll=True) over rows to
    # bound vreg live ranges, and hoist row shifts for the heaviest d2 groups (v5e vst slot).
    num = None
    for d2 in sorted(groups):
        gsum = None
        for (r, c) in groups[d2]:
            win = xcols[c][:, r:r + th, :]                   # sublane-only slice
            gsum = win if gsum is None else gsum + win
        term = gsum if d2 == 0 else gsum * epow(d2)          # ONE multiply per d2 group
        num = term if num is None else num + term

    out_ref[...] = (num * inv_den).astype(out_ref.dtype)


def adaptive_gaussian_filter(x, sigma, filter_size):
    """x: (B, C, H, W); sigma broadcastable to (B, 1, H, W) or (B, C, H, W)."""
    assert filter_size % 2 == 1, "Filter size must be odd."
    x = jnp.asarray(x)
    B, C, H, W = x.shape
    p = (filter_size - 1) // 2
    if p == 0:
        return x                                             # 1x1 filter normalizes to identity

    # sigma stays un-broadcast over B and C; the kernel broadcasts in VMEM.
    sig = jnp.asarray(sigma, jnp.float32)
    if sig.ndim < 4:
        sig = sig.reshape((1,) * (4 - sig.ndim) + sig.shape)
    assert sig.shape[0] in (1, B) and sig.shape[1] in (1, C)
    SB = B if sig.shape[0] == B else 1
    SC = C if sig.shape[1] == C else 1
    sig = jnp.broadcast_to(sig, (SB, SC, H, W))

    # ---- generation-aware VMEM budget ----
    try:
        vmem_cap = int(getattr(pltpu.get_tpu_info(), "vmem_capacity_bytes", 64 << 20))
    except Exception:
        vmem_cap = 64 << 20                                  # conservative (v7x per-core)
    budget = max(vmem_cap // 3, 16 << 20)

    def est_bytes(th):
        x_t = C * th * W * 4
        h_t = C * 2 * p * W * 4
        s_t = SC * th * W * 4
        o_t = C * th * W * 4
        xp_t = C * (th + 2 * p) * (W + 2 * p) * 4
        # double-buffered pipeline blocks + padded-tile scratch + in-kernel temporaries
        return 2 * (x_t + h_t + s_t + o_t) + (filter_size + 4) * xp_t + 10 * s_t + 2 * o_t

    # Always tile H when possible: enough grid steps to pipeline DMA behind compute and
    # to feed both v7x TensorCores, biggest tiles that still hit that target.
    n_target = 8 if B == 1 else 4
    cands = [d for d in range(8, H + 1, 8) if H % d == 0 and d >= p]
    tile_h = H
    if cands:
        fitting = [d for d in cands if est_bytes(d) <= budget]
        if fitting:
            pref = [d for d in fitting if H // d >= n_target]
            tile_h = max(pref) if pref else min(fitting)
        else:
            tile_h = min(cands)
    # TODO(synk): cdiv-based ragged last tile when H has no multiple-of-8 divisor.
    n_t = H // tile_h

    # ---- glue: tiny per-tile halo rows (reflection applied at image borders only) ----
    tops, bots = [], []
    for i in range(n_t):
        r0 = i * tile_h - p
        if r0 >= 0:
            top = x[:, :, r0:r0 + p, :]
        else:                                                # rows -p..-1  ->  rows p..1
            top = x[:, :, 1:p + 1, :][:, :, ::-1, :]
        r1 = (i + 1) * tile_h
        if r1 + p <= H:
            bot = x[:, :, r1:r1 + p, :]
        else:                                                # rows H..H+p-1 -> rows H-2..H-1-p
            bot = x[:, :, H - 1 - p:H - 1, :][:, :, ::-1, :]
        tops.append(top)
        bots.append(bot)
    halo = jnp.stack([jnp.concatenate([t, b], axis=2) for t, b in zip(tops, bots)],
                     axis=1)                                 # (B, n_t, C, 2p, W)

    x_spec = pl.BlockSpec((None, C, tile_h, W), lambda b, i: (b, 0, i, 0))
    halo_spec = pl.BlockSpec((None, None, C, 2 * p, W), lambda b, i: (b, i, 0, 0, 0))
    if SB == B:
        sig_spec = pl.BlockSpec((None, SC, tile_h, W), lambda b, i: (b, 0, i, 0))
    else:
        sig_spec = pl.BlockSpec((None, SC, tile_h, W), lambda b, i: (0, 0, i, 0))
    out_spec = pl.BlockSpec((None, C, tile_h, W), lambda b, i: (b, 0, i, 0))

    cparams = dict(dimension_semantics=("parallel", "parallel"))
    est = est_bytes(tile_h)
    if est > 12 * 1024 * 1024:
        cparams["vmem_limit_bytes"] = int(min(max(2 * est, 32 << 20),
                                              max(vmem_cap - (8 << 20), 32 << 20)))

    # TODO(synk): optional bf16 x path on v6e/v7x (halved VMEM/HBM for x); skipped to keep
    # the 1e-5 tolerance and the v5e (no bf16 VPU) path identical.
    kernel = functools.partial(_adaptive_gaussian_kernel, filter_size=filter_size)
    return pl.pallas_call(
        kernel,
        out_shape=jax.ShapeDtypeStruct((B, C, H, W), x.dtype),
        grid=(B, n_t),
        in_specs=[x_spec, halo_spec, sig_spec],
        out_specs=out_spec,
        scratch_shapes=[pltpu.VMEM((C, tile_h + 2 * p, W + 2 * p), jnp.float32)],
        compiler_params=pltpu.CompilerParams(**cparams),
    )(x, halo, sig)


def _reference(x, sigma, filter_size):
    """Pure-JAX mirror of the PyTorch forward (weights_init + shifted sums)."""
    B, C, H, W = x.shape
    mid = filter_size // 2
    p = (filter_size - 1) // 2
    sigma = jnp.broadcast_to(sigma, (B, C, H, W)).astype(jnp.float32)
    weights = [[None] * filter_size for _ in range(filter_size)]
    wsum = None
    for row in range(filter_size):
        for col in range(filter_size):
            base = -((row - mid) ** 2 + (col - mid) ** 2) / 2.0
            w = jnp.exp(jnp.full((B, C, H, W), base, jnp.float32) * sigma * sigma)
            weights[row][col] = w
            wsum = w if wsum is None else wsum + w
    x_pad = jnp.pad(x, ((0, 0), (0, 0), (p, p), (p, p)), mode="reflect")
    result = jnp.zeros_like(x)
    for row in range(filter_size):
        for col in range(filter_size):
            result = result + x_pad[:, :, row:row + H, col:col + W] * (
                weights[row][col] / wsum
            )
    return result


if __name__ == "__main__":
    FILTER_SIZE = 5
    key = jax.random.PRNGKey(0)
    k1, k2, k3, k4 = jax.random.split(key, 4)

    # case 1: B=2, channel-shared sigma, 16x16 -> two boundary H-tiles per image
    B, C, H, W = 2, 3, 16, 16  # module hard-codes 3 channels in base_weights
    x1 = jax.random.normal(k1, (B, C, H, W), dtype=jnp.float32)
    s1 = jax.random.uniform(k2, (B, 1, H, W), dtype=jnp.float32, minval=0.5, maxval=2.0)
    out1 = jax.block_until_ready(adaptive_gaussian_filter(x1, s1, FILTER_SIZE))
    ref1 = jax.block_until_ready(_reference(x1, s1, FILTER_SIZE))
    assert out1.shape == (B, C, H, W)
    assert jnp.allclose(out1, ref1, atol=1e-5, rtol=1e-5), "mismatch vs reference (case 1)"

    # case 2: B=1, per-channel sigma, 32x32 -> exercises interior H-tiles and SC=C
    B2, C2, H2, W2 = 1, 3, 32, 32
    x2 = jax.random.normal(k3, (B2, C2, H2, W2), dtype=jnp.float32)
    s2 = jax.random.uniform(k4, (B2, C2, H2, W2), dtype=jnp.float32, minval=0.5, maxval=2.0)
    out2 = jax.block_until_ready(adaptive_gaussian_filter(x2, s2, FILTER_SIZE))
    ref2 = jax.block_until_ready(_reference(x2, s2, FILTER_SIZE))
    assert jnp.allclose(out2, ref2, atol=1e-5, rtol=1e-5), "mismatch vs reference (case 2)"

    print("KERNEL_OK")
</pallas_src>

<mosaic_0001>
module attributes {stable_mosaic.version = 11 : i64} {
  func.func @_adaptive_gaussian_kernel(%arg0: i32, %arg1: i32, %arg2: memref<1x3x8x16xf32, #tpu.memory_space<vmem>>, %arg3: memref<1x1x3x4x16xf32, #tpu.memory_space<vmem>>, %arg4: memref<1x1x8x16xf32, #tpu.memory_space<vmem>>, %arg5: memref<1x3x8x16xf32, #tpu.memory_space<vmem>>, %arg6: memref<3x12x20xf32, #tpu.memory_space<vmem>>) attributes {dimension_semantics = [#tpu.dimension_semantics<parallel>, #tpu.dimension_semantics<parallel>], iteration_bounds = array<i64: 2, 2>, scalar_prefetch = 0 : i64, scratch_operands = 1 : i64, tpu.core_type = #tpu.core_type<tc>, window_params = [{transform_indices = @transform_0, window_bounds = array<i64: 1, 3, 8, 16>}, {transform_indices = @transform_1, window_bounds = array<i64: 1, 1, 3, 4, 16>}, {transform_indices = @transform_2, window_bounds = array<i64: 1, 1, 8, 16>}, {transform_indices = @transform_3, window_bounds = array<i64: 1, 3, 8, 16>}]} {
    %c0 = arith.constant 0 : index
    %c0_0 = arith.constant 0 : index
    %c0_1 = arith.constant 0 : index
    %c0_2 = arith.constant 0 : index
    %0 = vector.load %arg4[%c0, %c0_0, %c0_1, %c0_2] : memref<1x1x8x16xf32, #tpu.memory_space<vmem>>, vector<1x1x8x16xf32>
    %1 = vector.shape_cast %0 : vector<1x1x8x16xf32> to vector<1x8x16xf32>
    %2 = arith.mulf %1, %1 : vector<1x8x16xf32>
    %cst = arith.constant -5.000000e-01 : f32
    %3 = vector.broadcast %cst : f32 to vector<1x8x16xf32>
    %4 = arith.mulf %2, %3 : vector<1x8x16xf32>
    %5 = math.exp %4 : vector<1x8x16xf32>
    %cst_3 = arith.constant 1.000000e+00 : f32
    %6 = vector.broadcast %cst_3 : f32 to vector<1x8x16xf32>
    %cst_4 = arith.constant 4.000000e+00 : f32
    %7 = vector.broadcast %cst_4 : f32 to vector<1x8x16xf32>
    %8 = arith.mulf %7, %5 : vector<1x8x16xf32>
    %9 = arith.addf %6, %8 : vector<1x8x16xf32>
    %10 = arith.mulf %5, %5 : vector<1x8x16xf32>
    %cst_5 = arith.constant 4.000000e+00 : f32
    %11 = vector.broadcast %cst_5 : f32 to vector<1x8x16xf32>
    %12 = arith.mulf %11, %10 : vector<1x8x16xf32>
    %13 = arith.addf %9, %12 : vector<1x8x16xf32>
    %14 = arith.mulf %10, %10 : vector<1x8x16xf32>
    %cst_6 = arith.constant 4.000000e+00 : f32
    %15 = vector.broadcast %cst_6 : f32 to vector<1x8x16xf32>
    %16 = arith.mulf %15, %14 : vector<1x8x16xf32>
    %17 = arith.addf %13, %16 : vector<1x8x16xf32>
    %18 = arith.mulf %5, %10 : vector<1x8x16xf32>
    %19 = arith.mulf %10, %18 : vector<1x8x16xf32>
    %cst_7 = arith.constant 8.000000e+00 : f32
    %20 = vector.broadcast %cst_7 : f32 to vector<1x8x16xf32>
    %21 = arith.mulf %20, %19 : vector<1x8x16xf32>
    %22 = arith.addf %17, %21 : vector<1x8x16xf32>
    %23 = arith.mulf %14, %14 : vector<1x8x16xf32>
    %cst_8 = arith.constant 4.000000e+00 : f32
    %24 = vector.broadcast %cst_8 : f32 to vector<1x8x16xf32>
    %25 = arith.mulf %24, %23 : vector<1x8x16xf32>
    %26 = arith.addf %22, %25 : vector<1x8x16xf32>
    %27 = tpu.reciprocal %26 : vector<1x8x16xf32> -> vector<1x8x16xf32>
    %c0_9 = arith.constant 0 : index
    %c0_10 = arith.constant 0 : index
    %c0_11 = arith.constant 0 : index
    %c0_12 = arith.constant 0 : index
    %28 = vector.load %arg2[%c0_9, %c0_10, %c0_11, %c0_12] : memref<1x3x8x16xf32, #tpu.memory_space<vmem>>, vector<1x3x8x16xf32>
    %29 = vector.shape_cast %28 : vector<1x3x8x16xf32> to vector<3x8x16xf32>
    %c0_13 = arith.constant 0 : index
    %c2 = arith.constant 2 : index
    %c2_14 = arith.constant 2 : index
    %30 = vector.load %arg6[%c0_13, %c2, %c2_14] : memref<3x12x20xf32, #tpu.memory_space<vmem>>, vector<3x8x16xf32>
    tpu.vector_store %arg6[%c0_13, %c2, %c2_14], %29 {strides = array<i32>} : memref<3x12x20xf32, #tpu.memory_space<vmem>>, vector<3x8x16xf32>,
    %c0_15 = arith.constant 0 : index
    %c0_16 = arith.constant 0 : index
    %c0_17 = arith.constant 0 : index
    %c0_18 = arith.constant 0 : index
    %c0_19 = arith.constant 0 : index
    %31 = vector.load %arg3[%c0_15, %c0_16, %c0_17, %c0_18, %c0_19] : memref<1x1x3x4x16xf32, #tpu.memory_space<vmem>>, vector<1x1x3x2x16xf32>
    %32 = vector.shape_cast %31 : vector<1x1x3x2x16xf32> to vector<3x2x16xf32>
    %c0_20 = arith.constant 0 : index
    %c0_21 = arith.constant 0 : index
    %c2_22 = arith.constant 2 : index
    %33 = vector.load %arg6[%c0_20, %c0_21, %c2_22] : memref<3x12x20xf32, #tpu.memory_space<vmem>>, vector<3x2x16xf32>
    tpu.vector_store %arg6[%c0_20, %c0_21, %c2_22], %32 {strides = array<i32>} : memref<3x12x20xf32, #tpu.memory_space<vmem>>, vector<3x2x16xf32>,
    %c0_23 = arith.constant 0 : index
    %c0_24 = arith.constant 0 : index
    %c0_25 = arith.constant 0 : index
    %c2_26 = arith.constant 2 : index
    %c0_27 = arith.constant 0 : index
    %34 = vector.load %arg3[%c0_23, %c0_24, %c0_25, %c2_26, %c0_27] : memref<1x1x3x4x16xf32, #tpu.memory_space<vmem>>, vector<1x1x3x2x16xf32>
    %35 = vector.shape_cast %34 : vector<1x1x3x2x16xf32> to vector<3x2x16xf32>
    %c0_28 = arith.constant 0 : index
    %c10 = arith.constant 10 : index
    %c2_29 = arith.constant 2 : index
    %36 = vector.load %arg6[%c0_28, %c10, %c2_29] : memref<3x12x20xf32, #tpu.memory_space<vmem>>, vector<3x2x16xf32>
    tpu.vector_store %arg6[%c0_28, %c10, %c2_29], %35 {strides = array<i32>} : memref<3x12x20xf32, #tpu.memory_space<vmem>>, vector<3x2x16xf32>,
    %c0_30 = arith.constant 0 : index
    %c0_31 = arith.constant 0 : index
    %c3 = arith.constant 3 : index
    %37 = vector.load %arg6[%c0_30, %c0_31, %c3] : memref<3x12x20xf32, #tpu.memory_space<vmem>>, vector<3x12x1xf32>
    %c0_32 = arith.constant 0 : index
    %c0_33 = arith.constant 0 : index
    %c1 = arith.constant 1 : index
    %38 = vector.load %arg6[%c0_32, %c0_33, %c1] : memref<3x12x20xf32, #tpu.memory_space<vmem>>, vector<3x12x1xf32>
    tpu.vector_store %arg6[%c0_32, %c0_33, %c1], %37 {strides = array<i32>} : memref<3x12x20xf32, #tpu.memory_space<vmem>>, vector<3x12x1xf32>,
    %c0_34 = arith.constant 0 : index
    %c0_35 = arith.constant 0 : index
    %c16 = arith.constant 16 : index
    %39 = vector.load %arg6[%c0_34, %c0_35, %c16] : memref<3x12x20xf32, #tpu.memory_space<vmem>>, vector<3x12x1xf32>
    %c0_36 = arith.constant 0 : index
    %c0_37 = arith.constant 0 : index
    %c18 = arith.constant 18 : index
    %40 = vector.load %arg6[%c0_36, %c0_37, %c18] : memref<3x12x20xf32, #tpu.memory_space<vmem>>, vector<3x12x1xf32>
    tpu.vector_store %arg6[%c0_36, %c0_37, %c18], %39 {strides = array<i32>} : memref<3x12x20xf32, #tpu.memory_space<vmem>>, vector<3x12x1xf32>,
    %c0_38 = arith.constant 0 : index
    %c0_39 = arith.constant 0 : index
    %c4 = arith.constant 4 : index
    %41 = vector.load %arg6[%c0_38, %c0_39, %c4] : memref<3x12x20xf32, #tpu.memory_space<vmem>>, vector<3x12x1xf32>
    %c0_40 = arith.constant 0 : index
    %c0_41 = arith.constant 0 : index
    %c0_42 = arith.constant 0 : index
    %42 = vector.load %arg6[%c0_40, %c0_41, %c0_42] : memref<3x12x20xf32, #tpu.memory_space<vmem>>, vector<3x12x1xf32>
    tpu.vector_store %arg6[%c0_40, %c0_41, %c0_42], %41 {strides = array<i32>} : memref<3x12x20xf32, #tpu.memory_space<vmem>>, vector<3x12x1xf32>,
    %c0_43 = arith.constant 0 : index
    %c0_44 = arith.constant 0 : index
    %c15 = arith.constant 15 : index
    %43 = vector.load %arg6[%c0_43, %c0_44, %c15] : memref<3x12x20xf32, #tpu.memory_space<vmem>>, vector<3x12x1xf32>
    %c0_45 = arith.constant 0 : index
    %c0_46 = arith.constant 0 : index
    %c19 = arith.constant 19 : index
    %44 = vector.load %arg6[%c0_45, %c0_46, %c19] : memref<3x12x20xf32, #tpu.memory_space<vmem>>, vector<3x12x1xf32>
    tpu.vector_store %arg6[%c0_45, %c0_46, %c19], %43 {strides = array<i32>} : memref<3x12x20xf32, #tpu.memory_space<vmem>>, vector<3x12x1xf32>,
    %c0_47 = arith.constant 0 : index
    %c0_48 = arith.constant 0 : index
    %c0_49 = arith.constant 0 : index
    %45 = vector.load %arg6[%c0_47, %c0_48, %c0_49] : memref<3x12x20xf32, #tpu.memory_space<vmem>>, vector<3x12x16xf32>
    %c0_50 = arith.constant 0 : index
    %c0_51 = arith.constant 0 : index
    %c1_52 = arith.constant 1 : index
    %46 = vector.load %arg6[%c0_50, %c0_51, %c1_52] : memref<3x12x20xf32, #tpu.memory_space<vmem>>, vector<3x12x16xf32>
    %c0_53 = arith.constant 0 : index
    %c0_54 = arith.constant 0 : index
    %c2_55 = arith.constant 2 : index
    %47 = vector.load %arg6[%c0_53, %c0_54, %c2_55] : memref<3x12x20xf32, #tpu.memory_space<vmem>>, vector<3x12x16xf32>
    %c0_56 = arith.constant 0 : index
    %c0_57 = arith.constant 0 : index
    %c3_58 = arith.constant 3 : index
    %48 = vector.load %arg6[%c0_56, %c0_57, %c3_58] : memref<3x12x20xf32, #tpu.memory_space<vmem>>, vector<3x12x16xf32>
    %c0_59 = arith.constant 0 : index
    %c0_60 = arith.constant 0 : index
    %c4_61 = arith.constant 4 : index
    %49 = vector.load %arg6[%c0_59, %c0_60, %c4_61] : memref<3x12x20xf32, #tpu.memory_space<vmem>>, vector<3x12x16xf32>
    %50 = vector.extract_strided_slice %47 {offsets = [0, 2, 0], sizes = [3, 8, 16], strides = [1, 1, 1]} : vector<3x12x16xf32> to vector<3x8x16xf32>
    %51 = vector.extract_strided_slice %47 {offsets = [0, 1, 0], sizes = [3, 8, 16], strides = [1, 1, 1]} : vector<3x12x16xf32> to vector<3x8x16xf32>
    %52 = vector.extract_strided_slice %46 {offsets = [0, 2, 0], sizes = [3, 8, 16], strides = [1, 1, 1]} : vector<3x12x16xf32> to vector<3x8x16xf32>
    %53 = arith.addf %51, %52 : vector<3x8x16xf32>
    %54 = vector.extract_strided_slice %48 {offsets = [0, 2, 0], sizes = [3, 8, 16], strides = [1, 1, 1]} : vector<3x12x16xf32> to vector<3x8x16xf32>
    %55 = arith.addf %53, %54 : vector<3x8x16xf32>
    %56 = vector.extract_strided_slice %47 {offsets = [0, 3, 0], sizes = [3, 8, 16], strides = [1, 1, 1]} : vector<3x12x16xf32> to vector<3x8x16xf32>
    %57 = arith.addf %55, %56 : vector<3x8x16xf32>
    %58 = vector.broadcast %5 : vector<1x8x16xf32> to vector<3x8x16xf32>
    %59 = arith.mulf %57, %58 : vector<3x8x16xf32>
    %60 = arith.addf %50, %59 : vector<3x8x16xf32>
    %61 = vector.extract_strided_slice %46 {offsets = [0, 1, 0], sizes = [3, 8, 16], strides = [1, 1, 1]} : vector<3x12x16xf32> to vector<3x8x16xf32>
    %62 = vector.extract_strided_slice %48 {offsets = [0, 1, 0], sizes = [3, 8, 16], strides = [1, 1, 1]} : vector<3x12x16xf32> to vector<3x8x16xf32>
    %63 = arith.addf %61, %62 : vector<3x8x16xf32>
    %64 = vector.extract_strided_slice %46 {offsets = [0, 3, 0], sizes = [3, 8, 16], strides = [1, 1, 1]} : vector<3x12x16xf32> to vector<3x8x16xf32>
    %65 = arith.addf %63, %64 : vector<3x8x16xf32>
    %66 = vector.extract_strided_slice %48 {offsets = [0, 3, 0], sizes = [3, 8, 16], strides = [1, 1, 1]} : vector<3x12x16xf32> to vector<3x8x16xf32>
    %67 = arith.addf %65, %66 : vector<3x8x16xf32>
    %68 = vector.broadcast %10 : vector<1x8x16xf32> to vector<3x8x16xf32>
    %69 = arith.mulf %67, %68 : vector<3x8x16xf32>
    %70 = arith.addf %60, %69 : vector<3x8x16xf32>
    %71 = vector.extract_strided_slice %47 {offsets = [0, 0, 0], sizes = [3, 8, 16], strides = [1, 1, 1]} : vector<3x12x16xf32> to vector<3x8x16xf32>
    %72 = vector.extract_strided_slice %45 {offsets = [0, 2, 0], sizes = [3, 8, 16], strides = [1, 1, 1]} : vector<3x12x16xf32> to vector<3x8x16xf32>
    %73 = arith.addf %71, %72 : vector<3x8x16xf32>
    %74 = vector.extract_strided_slice %49 {offsets = [0, 2, 0], sizes = [3, 8, 16], strides = [1, 1, 1]} : vector<3x12x16xf32> to vector<3x8x16xf32>
    %75 = arith.addf %73, %74 : vector<3x8x16xf32>
    %76 = vector.extract_strided_slice %47 {offsets = [0, 4, 0], sizes = [3, 8, 16], strides = [1, 1, 1]} : vector<3x12x16xf32> to vector<3x8x16xf32>
    %77 = arith.addf %75, %76 : vector<3x8x16xf32>
    %78 = vector.broadcast %14 : vector<1x8x16xf32> to vector<3x8x16xf32>
    %79 = arith.mulf %77, %78 : vector<3x8x16xf32>
    %80 = arith.addf %70, %79 : vector<3x8x16xf32>
    %81 = vector.extract_strided_slice %46 {offsets = [0, 0, 0], sizes = [3, 8, 16], strides = [1, 1, 1]} : vector<3x12x16xf32> to vector<3x8x16xf32>
    %82 = vector.extract_strided_slice %48 {offsets = [0, 0, 0], sizes = [3, 8, 16], strides = [1, 1, 1]} : vector<3x12x16xf32> to vector<3x8x16xf32>
    %83 = arith.addf %81, %82 : vector<3x8x16xf32>
    %84 = vector.extract_strided_slice %45 {offsets = [0, 1, 0], sizes = [3, 8, 16], strides = [1, 1, 1]} : vector<3x12x16xf32> to vector<3x8x16xf32>
    %85 = arith.addf %83, %84 : vector<3x8x16xf32>
    %86 = vector.extract_strided_slice %49 {offsets = [0, 1, 0], sizes = [3, 8, 16], strides = [1, 1, 1]} : vector<3x12x16xf32> to vector<3x8x16xf32>
    %87 = arith.addf %85, %86 : vector<3x8x16xf32>
    %88 = vector.extract_strided_slice %45 {offsets = [0, 3, 0], sizes = [3, 8, 16], strides = [1, 1, 1]} : vector<3x12x16xf32> to vector<3x8x16xf32>
    %89 = arith.addf %87, %88 : vector<3x8x16xf32>
    %90 = vector.extract_strided_slice %49 {offsets = [0, 3, 0], sizes = [3, 8, 16], strides = [1, 1, 1]} : vector<3x12x16xf32> to vector<3x8x16xf32>
    %91 = arith.addf %89, %90 : vector<3x8x16xf32>
    %92 = vector.extract_strided_slice %46 {offsets = [0, 4, 0], sizes = [3, 8, 16], strides = [1, 1, 1]} : vector<3x12x16xf32> to vector<3x8x16xf32>
    %93 = arith.addf %91, %92 : vector<3x8x16xf32>
    %94 = vector.extract_strided_slice %48 {offsets = [0, 4, 0], sizes = [3, 8, 16], strides = [1, 1, 1]} : vector<3x12x16xf32> to vector<3x8x16xf32>
    %95 = arith.addf %93, %94 : vector<3x8x16xf32>
    %96 = vector.broadcast %19 : vector<1x8x16xf32> to vector<3x8x16xf32>
    %97 = arith.mulf %95, %96 : vector<3x8x16xf32>
    %98 = arith.addf %80, %97 : vector<3x8x16xf32>
    %99 = vector.extract_strided_slice %45 {offsets = [0, 0, 0], sizes = [3, 8, 16], strides = [1, 1, 1]} : vector<3x12x16xf32> to vector<3x8x16xf32>
    %100 = vector.extract_strided_slice %49 {offsets = [0, 0, 0], sizes = [3, 8, 16], strides = [1, 1, 1]} : vector<3x12x16xf32> to vector<3x8x16xf32>
    %101 = arith.addf %99, %100 : vector<3x8x16xf32>
    %102 = vector.extract_strided_slice %45 {offsets = [0, 4, 0], sizes = [3, 8, 16], strides = [1, 1, 1]} : vector<3x12x16xf32> to vector<3x8x16xf32>
    %103 = arith.addf %101, %102 : vector<3x8x16xf32>
    %104 = vector.extract_strided_slice %49 {offsets = [0, 4, 0], sizes = [3, 8, 16], strides = [1, 1, 1]} : vector<3x12x16xf32> to vector<3x8x16xf32>
    %105 = arith.addf %103, %104 : vector<3x8x16xf32>
    %106 = vector.broadcast %23 : vector<1x8x16xf32> to vector<3x8x16xf32>
    %107 = arith.mulf %105, %106 : vector<3x8x16xf32>
    %108 = arith.addf %98, %107 : vector<3x8x16xf32>
    %109 = vector.broadcast %27 : vector<1x8x16xf32> to vector<3x8x16xf32>
    %110 = arith.mulf %108, %109 : vector<3x8x16xf32>
    %c0_62 = arith.constant 0 : index
    %c0_63 = arith.constant 0 : index
    %c0_64 = arith.constant 0 : index
    %c0_65 = arith.constant 0 : index
    %111 = vector.load %arg5[%c0_62, %c0_63, %c0_64, %c0_65] : memref<1x3x8x16xf32, #tpu.memory_space<vmem>>, vector<1x3x8x16xf32>
    %112 = vector.shape_cast %111 : vector<1x3x8x16xf32> to vector<3x8x16xf32>
    %113 = vector.shape_cast %110 : vector<3x8x16xf32> to vector<1x3x8x16xf32>
    tpu.vector_store %arg5[%c0_62, %c0_63, %c0_64, %c0_65], %113 {strides = array<i32>} : memref<1x3x8x16xf32, #tpu.memory_space<vmem>>, vector<1x3x8x16xf32>,
    return
  }
  func.func @transform_0(%arg0: i32, %arg1: i32) -> (i32, i32, i32, i32) {
    %c0_i32 = arith.constant 0 : i32
    %c0_i32_0 = arith.constant 0 : i32
    %c0_i32_1 = arith.constant 0 : i32
    return %arg0, %c0_i32, %arg1, %c0_i32_0 : i32, i32, i32, i32
  }
  func.func @transform_1(%arg0: i32, %arg1: i32) -> (i32, i32, i32, i32, i32) {
    %c0_i32 = arith.constant 0 : i32
    %c0_i32_0 = arith.constant 0 : i32
    %c0_i32_1 = arith.constant 0 : i32
    %c0_i32_2 = arith.constant 0 : i32
    return %arg0, %arg1, %c0_i32, %c0_i32_0, %c0_i32_1 : i32, i32, i32, i32, i32
  }
  func.func @transform_2(%arg0: i32, %arg1: i32) -> (i32, i32, i32, i32) {
    %c0_i32 = arith.constant 0 : i32
    %c0_i32_0 = arith.constant 0 : i32
    %c0_i32_1 = arith.constant 0 : i32
    return %arg0, %c0_i32, %arg1, %c0_i32_0 : i32, i32, i32, i32
  }
  func.func @transform_3(%arg0: i32, %arg1: i32) -> (i32, i32, i32, i32) {
    %c0_i32 = arith.constant 0 : i32
    %c0_i32_0 = arith.constant 0 : i32
    %c0_i32_1 = arith.constant 0 : i32
    return %arg0, %c0_i32, %arg1, %c0_i32_0 : i32, i32, i32, i32
  }
}

</mosaic_0001>

<llo_original>
// kernel: tpu_custom_call.1
$region0: #{tpu_custom_call.1}
  #allocation0 [shape = 'u32[]', space=smem, size = 0x4, offset = 0x4, fixed_abs, tag = 'smem constant byte address 0x4 - core index']
  #allocation1 [shape = 'u32[72,128]{1,0:T(1,128)}', space=vmem, size = 0x9000, scoped, tag = 'internal scratch']
  #allocation2 [shape = 'f32[3,12,20]{2,1,0:T(8,128)}', space=vmem, size = 0x6000, scoped, tag = 'scratch operand']
  %s0 = inlined_call_operand.hbm [shape: f32[2,3,16,16], index: 0, kind: input, shape index: {}]
  %s1 = inlined_call_operand.hbm [shape: f32[2,2,3,4,16], index: 1, kind: input, shape index: {}]
  %s2 = inlined_call_operand.hbm [shape: f32[2,1,16,16], index: 2, kind: input, shape index: {}]
  %s3 = inlined_call_operand.hbm [shape: f32[2,3,16,16], index: 3, kind: output, shape index: {}]
  %s4 = sld [smem:[#allocation0]]
  $region57: #{tpu_custom_call.1} parent=0
    _
  %s6 = ssub.s32 1, %s4
  %s7 = scalar_select 0, %s6, %s4
  $region1: #{tpu_custom_call.1} parent=0
    #allocation3 [shape = 'u8[24576]{0}', space=vmem, size = 0x6000, scoped, tag = 'input window, operand 0']
    #allocation4 [shape = 's32[2]{0}', space=sflag, size = 0x8, scoped, tag = 'scoped memory for tpu_custom_call.1']
    #allocation5 [shape = 's32[2]{0}', space=sflag, size = 0x8, scoped, tag = 'scoped memory for tpu_custom_call.1']
    #allocation6 [shape = 'u8[12288]{0}', space=vmem, size = 0x3000, scoped, tag = 'input window, operand 1']
    #allocation7 [shape = 's32[2]{0}', space=sflag, size = 0x8, scoped, tag = 'scoped memory for tpu_custom_call.1']
    #allocation8 [shape = 'u8[8192]{0}', space=vmem, size = 0x2000, scoped, tag = 'input window, operand 2']
    #allocation9 [shape = 'u8[24576]{0}', space=vmem, size = 0x6000, scoped, tag = 'output window, operand 0']
    %8 = vsyncpa [#allocation4], 0
    %s9 = scalar_lea.sflag [#allocation4], 1
    %10 = vsyncpa %s9, 0
    %11 = vsyncpa [#allocation7], 0
    %s12 = scalar_lea.sflag [#allocation7], 1
    %13 = vsyncpa %s12, 0
    %14 = vsyncpa [#allocation5], 0
    %s15 = scalar_lea.sflag [#allocation5], 1
    %16 = vsyncpa %s15, 0
    loop: start=0, step=1, limit=6
    $region2: #{tpu_custom_call.1} parent=1 // loop_pre_header
      _
    $region3: #{tpu_custom_call.1} parent=1 // loop_header
      %s18 = sphi 0, %s22
      %p19 = scmp.ge.s32.totalorder %s18, 6
      %s25 = sphi 0, %s37
      %s26 = sphi 0, %s33
      %s27 = sphi 0, %s25
      %s28 = sphi 0, %s26
      %s29 = sphi 0, %s27
      %s30 = sphi 0, %s28
      %s42 = sphi 0, %s44
      %s45 = sphi 0, %s42
      %s46 = sphi 0, %s45
      %s62 = sphi 0, %s46
      %s70 = sphi 0, %s72
      %s73 = sphi 0, %s70
      %s74 = sphi 0, %s73
      %s90 = sphi 0, %s74
      %s98 = sphi 0, %s100
      %s101 = sphi 0, %s98
      %s102 = sphi 0, %s101
      %s118 = sphi 0, %s102
      %s126 = sphi 0, %s128
      %s129 = sphi 0, %s126
      %s130 = sphi 0, %s129
      %s146 = sphi 0, %s130
    $region4: #{tpu_custom_call.1} parent=1 // loop_header_branch
      %21 = sbr.rel (%p19) target = $region8
    $region5: #{tpu_custom_call.1} parent=1 // loop_body
      %s23 = ssub.s32 %s18, 1
      %s24 = ssub.s32 %s18, 2
      %s31 = sadd.s32 1, %s26
      %p32 = scmp.ge.s32.totalorder %s31, 2
      %s33 = scalar_select %p32, 0, %s31
      %s34 = sadd.s32 1, %s25
      %s35 = scalar_select %p32, %s34, %s25
      %p36 = scmp.ge.s32.totalorder %s35, 2
      %s37 = scalar_select %p36, 0, %s35
      %s38 = ssub.s32 %s25, %s37
      %s39 = ssub.s32 %s26, %s33
      %s40 = sor.u32 %s38, %s39
      %p41 = scmp.eq.s32.totalorder %s40, 0
      %s43 = sadd.s32 %s42, 1
      %s44 = scalar_select %p41, %s42, %s43
      %p47 = pneg %p41
      %p48 = scmp.eq.s32.totalorder %s18, 3
      %p49 = por %p47, %p48
      %p50 = scmp.ne.s32.totalorder %s42, %s45
      %p51 = scmp.eq.s32.totalorder %s18, 0
      %p52 = por %p50, %p51
      %p53 = scmp.ne.s32.totalorder %s42, %s45
      %p54 = scmp.eq.s32.totalorder %s23, 3
      %p55 = por %p53, %p54
      %p56 = scmp.ne.s32.totalorder %s45, %s46
      %p57 = scmp.eq.s32.totalorder %s23, 0
      %p58 = por %p56, %p57
      %p59 = scmp.ne.s32.totalorder %s45, %s46
      %p60 = scmp.eq.s32.totalorder %s24, 3
      %p61 = por %p59, %p60
      %p63 = scmp.ne.s32.totalorder %s46, %s62
      %p64 = scmp.eq.s32.totalorder %s24, 0
      %p65 = por %p63, %p64
      %s66 = ssub.s32 %s25, %s37
      %s67 = ssub.s32 %s26, %s33
      %s68 = sor.u32 %s66, %s67
      %p69 = scmp.eq.s32.totalorder %s68, 0
      %s71 = sadd.s32 %s70, 1
      %s72 = scalar_select %p69, %s70, %s71
      %p75 = pneg %p69
      %p76 = scmp.eq.s32.totalorder %s18, 3
      %p77 = por %p75, %p76
      %p78 = scmp.ne.s32.totalorder %s70, %s73
      %p79 = scmp.eq.s32.totalorder %s18, 0
      %p80 = por %p78, %p79
      %p81 = scmp.ne.s32.totalorder %s70, %s73
      %p82 = scmp.eq.s32.totalorder %s23, 3
      %p83 = por %p81, %p82
      %p84 = scmp.ne.s32.totalorder %s73, %s74
      %p85 = scmp.eq.s32.totalorder %s23, 0
      %p86 = por %p84, %p85
      %p87 = scmp.ne.s32.totalorder %s73, %s74
      %p88 = scmp.eq.s32.totalorder %s24, 3
      %p89 = por %p87, %p88
      %p91 = scmp.ne.s32.totalorder %s74, %s90
      %p92 = scmp.eq.s32.totalorder %s24, 0
      %p93 = por %p91, %p92
      %s94 = ssub.s32 %s25, %s37
      %s95 = ssub.s32 %s26, %s33
      %s96 = sor.u32 %s94, %s95
      %p97 = scmp.eq.s32.totalorder %s96, 0
      %s99 = sadd.s32 %s98, 1
      %s100 = scalar_select %p97, %s98, %s99
      %p103 = pneg %p97
      %p104 = scmp.eq.s32.totalorder %s18, 3
      %p105 = por %p103, %p104
      %p106 = scmp.ne.s32.totalorder %s98, %s101
      %p107 = scmp.eq.s32.totalorder %s18, 0
      %p108 = por %p106, %p107
      %p109 = scmp.ne.s32.totalorder %s98, %s101
      %p110 = scmp.eq.s32.totalorder %s23, 3
      %p111 = por %p109, %p110
      %p112 = scmp.ne.s32.totalorder %s101, %s102
      %p113 = scmp.eq.s32.totalorder %s23, 0
      %p114 = por %p112, %p113
      %p115 = scmp.ne.s32.totalorder %s101, %s102
      %p116 = scmp.eq.s32.totalorder %s24, 3
      %p117 = por %p115, %p116
      %p119 = scmp.ne.s32.totalorder %s102, %s118
      %p120 = scmp.eq.s32.totalorder %s24, 0
      %p121 = por %p119, %p120
      %s122 = ssub.s32 %s25, %s37
      %s123 = ssub.s32 %s26, %s33
      %s124 = sor.u32 %s122, %s123
      %p125 = scmp.eq.s32.totalorder %s124, 0
      %s127 = sadd.s32 %s126, 1
      %s128 = scalar_select %p125, %s126, %s127
      %p131 = pneg %p125
      %p132 = scmp.eq.s32.totalorder %s18, 3
      %p133 = por %p131, %p132
      %p134 = scmp.ne.s32.totalorder %s126, %s129
      %p135 = scmp.eq.s32.totalorder %s18, 0
      %p136 = por %p134, %p135
      %p137 = scmp.ne.s32.totalorder %s126, %s129
      %p138 = scmp.eq.s32.totalorder %s23, 3
      %p139 = por %p137, %p138
      %p140 = scmp.ne.s32.totalorder %s129, %s130
      %p141 = scmp.eq.s32.totalorder %s23, 0
      %p142 = por %p140, %p141
      %p143 = scmp.ne.s32.totalorder %s129, %s130
      %p144 = scmp.eq.s32.totalorder %s24, 3
      %p145 = por %p143, %p144
      %p147 = scmp.ne.s32.totalorder %s130, %s146
      %p148 = scmp.eq.s32.totalorder %s24, 0
      %p149 = por %p147, %p148
      %p150 = scmp.le.s32.totalorder 1, %s18
      %p151 = scmp.lt.s32.totalorder %s18, 5
      %p152 = pnand %p150, %p151
      %p153 = pneg %p152
      // Predicated region
      $region9: #{tpu_custom_call.1} parent=5 // pred_check
        _
      $region10: #{tpu_custom_call.1} parent=5 // pred_check_branch
        %155 = sbr.rel (%p152) target = $region12
      $region11: #{tpu_custom_call.1} parent=5 // pred_region
        %s156 = ssub.s32 %s18, 1
      $region12: #{tpu_custom_call.1} parent=5 // pred_fallthru
        _
      %p157 = scmp.lt.s32.totalorder %s18, 4
      // Predicated region
      $region13: #{tpu_custom_call.1} parent=5 // pred_check
        %p158 = pneg %p157
      $region14: #{tpu_custom_call.1} parent=5 // pred_check_branch
        %160 = sbr.rel (%p158) target = $region16
      $region15: #{tpu_custom_call.1} parent=5 // pred_region
        // Predicated region
        $region17: #{tpu_custom_call.1} parent=15 // pred_check
          %p161 = pneg %p52
        $region18: #{tpu_custom_call.1} parent=15 // pred_check_branch
          %163 = sbr.rel (%p161) target = $region20
        $region19: #{tpu_custom_call.1} parent=15 // pred_region
          %s164 = sand.u32 %s42, 1
          %s165 = scalar_lea.sflag [#allocation4], %s164
          %s166 = sand.u32 %s42, 1
          %s167 = smul.addr %s166, 24
          %s168 = scalar_lea.vmem [#allocation3], %s167
          %170 = vsyncadd %s165, 0
          %s171 = smul.addr %s25, 6
          %s172 = sadd.s32 %s26, %s171
          %s173 = smul.addr %s172, 8
          %s174 = scalar_lea.hbm %s0, %s173
          %s175 = sshll.u32 %s174, 4
          %s176 = int_to_ptr.hbm [resolvable:$true] %s175
          %s177 = sshll.u32 %s168, 4
          %s178 = int_to_ptr.vmem [resolvable:$true] %s177
          %183 = dma.hbm_to_vmem [thread:$0]  %s176, 384, %s178, %s165, 256, 128, 8
        $region20: #{tpu_custom_call.1} parent=15 // pred_fallthru
          _
        // Predicated region
        $region21: #{tpu_custom_call.1} parent=15 // pred_check
          %p184 = pneg %p80
        $region22: #{tpu_custom_call.1} parent=15 // pred_check_branch
          %186 = sbr.rel (%p184) target = $region24
        $region23: #{tpu_custom_call.1} parent=15 // pred_region
          %s187 = sand.u32 %s18, 1
          %s188 = scalar_lea.sflag [#allocation7], %s187
          %s189 = sand.u32 %s70, 1
          %s190 = smul.addr %s189, 12
          %s191 = scalar_lea.vmem [#allocation6], %s190
          %193 = vsyncadd %s188, 0
          %s194 = smul.addr %s26, 3
          %s195 = smul.addr %s25, 6
          %s196 = sadd.s32 %s194, %s195
          %s197 = smul.addr %s196, 4
          %s198 = scalar_lea.hbm %s1, %s197
          %s199 = sshll.u32 %s198, 4
          %s200 = int_to_ptr.hbm [resolvable:$true] %s199
          %s201 = sshll.u32 %s191, 4
          %s202 = int_to_ptr.vmem [resolvable:$true] %s201
          %207 = dma.hbm_to_vmem [thread:$0]  %s200, 192, %s202, %s188, 64, 64, 4
        $region24: #{tpu_custom_call.1} parent=15 // pred_fallthru
          _
        // Predicated region
        $region25: #{tpu_custom_call.1} parent=15 // pred_check
          %p208 = pneg %p108
        $region26: #{tpu_custom_call.1} parent=15 // pred_check_branch
          %210 = sbr.rel (%p208) target = $region28
        $region27: #{tpu_custom_call.1} parent=15 // pred_region
          %s211 = sand.u32 %s18, 1
          %s212 = scalar_lea.sflag [#allocation7], %s211
          %s213 = sand.u32 %s98, 1
          %s214 = smul.addr %s213, 8
          %s215 = scalar_lea.vmem [#allocation8], %s214
          %217 = vsyncadd %s212, 0
          %s218 = smul.addr %s25, 2
          %s219 = sadd.s32 %s26, %s218
          %s220 = smul.addr %s219, 8
          %s221 = scalar_lea.hbm %s2, %s220
          %s223 = sshll.u32 %s221, 4
          %s224 = int_to_ptr.hbm [resolvable:$true] %s223
          %s225 = sshll.u32 %s215, 4
          %s226 = int_to_ptr.vmem [resolvable:$true] %s225
          %228 = dma.hbm_to_vmem [thread:$0]  %s224, 128, %s226, %s212
        $region28: #{tpu_custom_call.1} parent=15 // pred_fallthru
          _
      $region16: #{tpu_custom_call.1} parent=5 // pred_fallthru
        _
      %p229 = scmp.le.s32.totalorder 1, %s18
      %p230 = scmp.lt.s32.totalorder %s18, 5
      %p231 = pnand %p229, %p230
      %p232 = pneg %p231
      // Predicated region
      $region29: #{tpu_custom_call.1} parent=5 // pred_check
        _
      $region30: #{tpu_custom_call.1} parent=5 // pred_check_branch
        %234 = sbr.rel (%p231) target = $region32
      $region31: #{tpu_custom_call.1} parent=5 // pred_region
        %s235 = ssub.s32 %s18, 1
        %s236 = sand.u32 %s45, 1
        %s237 = scalar_lea.sflag [#allocation4], %s236
        %s238 = sand.u32 %s45, 1
        %s239 = smul.addr %s238, 24
        %s240 = scalar_lea.vmem [#allocation3], %s239
        // Predicated region
        $region33: #{tpu_custom_call.1} parent=31 // pred_check
          %p241 = pneg %p58
        $region34: #{tpu_custom_call.1} parent=31 // pred_check_branch
          %243 = sbr.rel (%p241) target = $region36
        $region35: #{tpu_custom_call.1} parent=31 // pred_region
          %245 = dma.done %s237, 384
        $region36: #{tpu_custom_call.1} parent=31 // pred_fallthru
          _
        %s246 = sand.u32 %s23, 1
        %s247 = scalar_lea.sflag [#allocation7], %s246
        %s248 = sand.u32 %s73, 1
        %s249 = smul.addr %s248, 12
        %s250 = scalar_lea.vmem [#allocation6], %s249
        // Predicated region
        $region37: #{tpu_custom_call.1} parent=31 // pred_check
          %p251 = pneg %p86
        $region38: #{tpu_custom_call.1} parent=31 // pred_check_branch
          %253 = sbr.rel (%p251) target = $region40
        $region39: #{tpu_custom_call.1} parent=31 // pred_region
          %255 = dma.done %s247, 192
        $region40: #{tpu_custom_call.1} parent=31 // pred_fallthru
          _
        %s256 = sand.u32 %s23, 1
        %s257 = scalar_lea.sflag [#allocation7], %s256
        %s258 = sand.u32 %s101, 1
        %s259 = smul.addr %s258, 8
        %s260 = scalar_lea.vmem [#allocation8], %s259
        // Predicated region
        $region41: #{tpu_custom_call.1} parent=31 // pred_check
          %p261 = pneg %p114
        $region42: #{tpu_custom_call.1} parent=31 // pred_check_branch
          %263 = sbr.rel (%p261) target = $region44
        $region43: #{tpu_custom_call.1} parent=31 // pred_region
          %265 = dma.done %s257, 128
        $region44: #{tpu_custom_call.1} parent=31 // pred_fallthru
          _
        %s266 = sand.u32 %s45, 1
        %s267 = scalar_lea.sflag [#allocation4], %s266
        %s268 = sand.u32 %s45, 1
        %s269 = smul.addr %s268, 24
        %s270 = scalar_lea.vmem [#allocation3], %s269
        %p271 = pneg %p58
        %p272 = pneg %p55
        %s273 = sand.u32 %s23, 1
        %s274 = scalar_lea.sflag [#allocation7], %s273
        %s275 = sand.u32 %s73, 1
        %s276 = smul.addr %s275, 12
        %s277 = scalar_lea.vmem [#allocation6], %s276
        %p278 = pneg %p86
        %p279 = pneg %p83
        %s280 = sand.u32 %s23, 1
        %s281 = scalar_lea.sflag [#allocation7], %s280
        %s282 = sand.u32 %s101, 1
        %s283 = smul.addr %s282, 8
        %s284 = scalar_lea.vmem [#allocation8], %s283
        %p285 = pneg %p114
        %p286 = pneg %p111
        %p287 = pneg %p142
        %p288 = pneg %p139
        %s289 = sand.u32 %s129, 1
        %s290 = scalar_lea.sflag [#allocation5], %s289
        %s291 = sand.u32 %s129, 1
        %s292 = smul.addr %s291, 24
        %s293 = scalar_lea.vmem [#allocation9], %s292
        %v294 = vld [vmem:[%s260] sm:$0xff]
        %v295 = vmul.f32 %v294, %v294
        %v296 = vmul.f32 %v295, -0.5
        %v297 = vmul.f32 %v296, 1.442695
        %v298 = vpow.pop %v297
        %v299 = vmul.f32 %v298, 4.0
        %v300 = vadd.f32 %v299, 1.0
        %v301 = vmul.f32 %v298, %v298
        %v302 = vmul.f32 %v301, 4.0
        %v303 = vadd.f32 %v300, %v302
        %v304 = vmul.f32 %v301, %v301
        %v305 = vmul.f32 %v304, 4.0
        %v306 = vadd.f32 %v303, %v305
        %v307 = vmul.f32 %v298, %v301
        %v308 = vmul.f32 %v301, %v307
        %v309 = vmul.f32 %v308, 8.0
        %v310 = vadd.f32 %v306, %v309
        %v311 = vmul.f32 %v304, %v304
        %v312 = vmul.f32 %v311, 4.0
        %v313 = vadd.f32 %v310, %v312
        %v314 = vrcp.pop %v313
        %v315 = vmul.f32 %v313, %v314
        %v316 = vsub.f32 1.0, %v315
        %v317 = vmul.f32 %v314, %v316
        %v318 = vadd.f32 %v314, %v317
        %vm319 = vweird.f32 %v313
        %vm320 = vweird.f32 %v314
        %vm321 = vmor %vm319, %vm320
        %v322 = vsel %vm321, %v314, %v318
        %v323 = vand.u32 2147483647, %v313
        %vm324 = vcmp.eq.f32.partialorder %v323, 8.507059e+37
        %v325 = vand.u32 %v313, 2147483648
        %v326 = vor.u32 1.1754944e-38, %v325
        %v327 = vsel %vm324, %v326, %v322
        %v328 = vld [vmem:[%s240] sm:$0xff]
        %v329 = vld [vmem:[%s240 + $0x8] sm:$0xff]
        %v330 = vld [vmem:[%s240 + $0x10] sm:$0xff]
        %334 = vrot.lane.b32.xlu0 %v328, 2
        %v335 = vpop.permute.xlu0 %334
        %336 = vrot.lane.b32.xlu0 %v329, 2
        %v337 = vpop.permute.xlu0 %336
        %338 = vrot.lane.b32.xlu0 %v330, 2
        %v339 = vpop.permute.xlu0 %338
        %vm343 = vcmask 146448
        %344 = vst.msk [vmem:[#allocation2 + $0x2] sm:$0xff] %vm343, %v335
        %345 = vst.msk [vmem:[#allocation2 + $0x12] sm:$0xff] %vm343, %v337
        %346 = vst.msk [vmem:[#allocation2 + $0x22] sm:$0xff] %vm343, %v339
        %v347 = vld [vmem:[%s250] sm:$0x3]
        %v348 = vld [vmem:[%s250 + $0x4] sm:$0x3]
        %v349 = vld [vmem:[%s250 + $0x8] sm:$0x3]
        %353 = vrot.lane.b32.xlu0 %v347, 2
        %v354 = vpop.permute.xlu0 %353
        %355 = vrot.lane.b32.xlu0 %v348, 2
        %v356 = vpop.permute.xlu0 %355
        %357 = vrot.lane.b32.xlu0 %v349, 2
        %v358 = vpop.permute.xlu0 %357
        %vm362 = vcmask 140304
        %363 = vst.msk [vmem:[#allocation2] sm:$0x3] %vm362, %v354
        %364 = vst.msk [vmem:[#allocation2 + $0x10] sm:$0x3] %vm362, %v356
        %365 = vst.msk [vmem:[#allocation2 + $0x20] sm:$0x3] %vm362, %v358
        %v366 = vld [vmem:[%s250 + $0x2] sm:$0x3]
        %v367 = vld [vmem:[%s250 + $0x6] sm:$0x3]
        %v368 = vld [vmem:[%s250 + $0xa] sm:$0x3]
        %372 = vrot.lane.b32.xlu0 %v366, 2
        %v373 = vpop.permute.xlu0 %372
        %374 = vrot.lane.b32.xlu0 %v367, 2
        %v375 = vpop.permute.xlu0 %374
        %376 = vrot.lane.b32.xlu0 %v368, 2
        %v377 = vpop.permute.xlu0 %376
        %381 = vst.msk [vmem:[#allocation2 + $0xa] sm:$0x3] %vm362, %v373
        %382 = vst.msk [vmem:[#allocation2 + $0x1a] sm:$0x3] %vm362, %v375
        %383 = vst.msk [vmem:[#allocation2 + $0x2a] sm:$0x3] %vm362, %v377
        %v384 = vld [vmem:[#allocation2] sm:$0xff]
        %v385 = vld [vmem:[#allocation2 + $0x8] sm:$0xf]
        %v386 = vld [vmem:[#allocation2 + $0x10] sm:$0xff]
        %v387 = vld [vmem:[#allocation2 + $0x18] sm:$0xf]
        %v388 = vld [vmem:[#allocation2 + $0x20] sm:$0xff]
        %v389 = vld [vmem:[#allocation2 + $0x28] sm:$0xf]
        %396 = vrot.lane.b32.xlu0 %v384, 126
        %v397 = vpop.permute.xlu0 %396
        %398 = vrot.lane.b32.xlu0 %v385, 126
        %v399 = vpop.permute.xlu0 %398
        %400 = vrot.lane.b32.xlu0 %v386, 126
        %v401 = vpop.permute.xlu0 %400
        %402 = vrot.lane.b32.xlu0 %v387, 126
        %v403 = vpop.permute.xlu0 %402
        %404 = vrot.lane.b32.xlu0 %v388, 126
        %v405 = vpop.permute.xlu0 %404
        %406 = vrot.lane.b32.xlu0 %v389, 126
        %v407 = vpop.permute.xlu0 %406
        %vm414 = vcmask 15368
        %415 = vst.msk [vmem:[#allocation2] sm:$0xff] %vm414, %v397
        %vm416 = vcmask 11272
        %417 = vst.msk [vmem:[#allocation2 + $0x8] sm:$0xf] %vm416, %v399
        %418 = vst.msk [vmem:[#allocation2 + $0x10] sm:$0xff] %vm414, %v401
        %419 = vst.msk [vmem:[#allocation2 + $0x18] sm:$0xf] %vm416, %v403
        %420 = vst.msk [vmem:[#allocation2 + $0x20] sm:$0xff] %vm414, %v405
        %421 = vst.msk [vmem:[#allocation2 + $0x28] sm:$0xf] %vm416, %v407
        %v422 = vld [vmem:[#allocation2] sm:$0xff]
        %v423 = vld [vmem:[#allocation2 + $0x8] sm:$0xf]
        %v424 = vld [vmem:[#allocation2 + $0x10] sm:$0xff]
        %v425 = vld [vmem:[#allocation2 + $0x18] sm:$0xf]
        %v426 = vld [vmem:[#allocation2 + $0x20] sm:$0xff]
        %v427 = vld [vmem:[#allocation2 + $0x28] sm:$0xf]
        %434 = vrot.lane.b32.xlu0 %v422, 2
        %v435 = vpop.permute.xlu0 %434
        %436 = vrot.lane.b32.xlu0 %v423, 2
        %v437 = vpop.permute.xlu0 %436
        %438 = vrot.lane.b32.xlu0 %v424, 2
        %v439 = vpop.permute.xlu0 %438
        %440 = vrot.lane.b32.xlu0 %v425, 2
        %v441 = vpop.permute.xlu0 %440
        %442 = vrot.lane.b32.xlu0 %v426, 2
        %v443 = vpop.permute.xlu0 %442
        %444 = vrot.lane.b32.xlu0 %v427, 2
        %v445 = vpop.permute.xlu0 %444
        %vm452 = vcmask 154768
        %453 = vst.msk [vmem:[#allocation2] sm:$0xff] %vm452, %v435
        %vm454 = vcmask 150672
        %455 = vst.msk [vmem:[#allocation2 + $0x8] sm:$0xf] %vm454, %v437
        %456 = vst.msk [vmem:[#allocation2 + $0x10] sm:$0xff] %vm452, %v439
        %457 = vst.msk [vmem:[#allocation2 + $0x18] sm:$0xf] %vm454, %v441
        %458 = vst.msk [vmem:[#allocation2 + $0x20] sm:$0xff] %vm452, %v443
        %459 = vst.msk [vmem:[#allocation2 + $0x28] sm:$0xf] %vm454, %v445
        %v460 = vld [vmem:[#allocation2] sm:$0xff]
        %v461 = vld [vmem:[#allocation2 + $0x8] sm:$0xf]
        %v462 = vld [vmem:[#allocation2 + $0x10] sm:$0xff]
        %v463 = vld [vmem:[#allocation2 + $0x18] sm:$0xf]
        %v464 = vld [vmem:[#allocation2 + $0x20] sm:$0xff]
        %v465 = vld [vmem:[#allocation2 + $0x28] sm:$0xf]
        %472 = vrot.lane.b32.xlu0 %v460, 124
        %v473 = vpop.permute.xlu0 %472
        %474 = vrot.lane.b32.xlu0 %v461, 124
        %v475 = vpop.permute.xlu0 %474
        %476 = vrot.lane.b32.xlu0 %v462, 124
        %v477 = vpop.permute.xlu0 %476
        %478 = vrot.lane.b32.xlu0 %v463, 124
        %v479 = vpop.permute.xlu0 %478
        %480 = vrot.lane.b32.xlu0 %v464, 124
        %v481 = vpop.permute.xlu0 %480
        %482 = vrot.lane.b32.xlu0 %v465, 124
        %v483 = vpop.permute.xlu0 %482
        %vm490 = vcmask 7168
        %491 = vst.msk [vmem:[#allocation2] sm:$0xff] %vm490, %v473
        %vm492 = vcmask 3072
        %493 = vst.msk [vmem:[#allocation2 + $0x8] sm:$0xf] %vm492, %v475
        %494 = vst.msk [vmem:[#allocation2 + $0x10] sm:$0xff] %vm490, %v477
        %495 = vst.msk [vmem:[#allocation2 + $0x18] sm:$0xf] %vm492, %v479
        %496 = vst.msk [vmem:[#allocation2 + $0x20] sm:$0xff] %vm490, %v481
        %497 = vst.msk [vmem:[#allocation2 + $0x28] sm:$0xf] %vm492, %v483
        %v498 = vld [vmem:[#allocation2] sm:$0xff]
        %v499 = vld [vmem:[#allocation2 + $0x8] sm:$0xf]
        %v500 = vld [vmem:[#allocation2 + $0x10] sm:$0xff]
        %v501 = vld [vmem:[#allocation2 + $0x18] sm:$0xf]
        %v502 = vld [vmem:[#allocation2 + $0x20] sm:$0xff]
        %v503 = vld [vmem:[#allocation2 + $0x28] sm:$0xf]
        %510 = vrot.lane.b32.xlu0 %v498, 4
        %v511 = vpop.permute.xlu0 %510
        %512 = vrot.lane.b32.xlu0 %v499, 4
        %v513 = vpop.permute.xlu0 %512
        %514 = vrot.lane.b32.xlu0 %v500, 4
        %v515 = vpop.permute.xlu0 %514
        %516 = vrot.lane.b32.xlu0 %v501, 4
        %v517 = vpop.permute.xlu0 %516
        %518 = vrot.lane.b32.xlu0 %v502, 4
        %v519 = vpop.permute.xlu0 %518
        %520 = vrot.lane.b32.xlu0 %v503, 4
        %v521 = vpop.permute.xlu0 %520
        %vm528 = vcmask 162968
        %529 = vst.msk [vmem:[#allocation2] sm:$0xff] %vm528, %v511
        %vm530 = vcmask 158872
        %531 = vst.msk [vmem:[#allocation2 + $0x8] sm:$0xf] %vm530, %v513
        %532 = vst.msk [vmem:[#allocation2 + $0x10] sm:$0xff] %vm528, %v515
        %533 = vst.msk [vmem:[#allocation2 + $0x18] sm:$0xf] %vm530, %v517
        %534 = vst.msk [vmem:[#allocation2 + $0x20] sm:$0xff] %vm528, %v519
        %535 = vst.msk [vmem:[#allocation2 + $0x28] sm:$0xf] %vm530, %v521
        %v536 = vld [vmem:[#allocation2] sm:$0xff]
        %v537 = vld [vmem:[#allocation2 + $0x8] sm:$0xf]
        %v538 = vld [vmem:[#allocation2 + $0x10] sm:$0xff]
        %v539 = vld [vmem:[#allocation2 + $0x18] sm:$0xf]
        %v540 = vld [vmem:[#allocation2 + $0x20] sm:$0xff]
        %v541 = vld [vmem:[#allocation2 + $0x28] sm:$0xf]
        %vm548 = vcmask 1046528
        %v549 = vrot.slane %v536, 1
        %v550 = vrot.slane %v537, 1
        %v551 = vsel %vm548, %v549, %v550
        %v552 = vrot.slane %v538, 1
        %v553 = vrot.slane %v539, 1
        %v554 = vsel %vm548, %v552, %v553
        %v555 = vrot.slane %v540, 1
        %v556 = vrot.slane %v541, 1
        %v557 = vsel %vm548, %v555, %v556
        %558 = vrot.lane.b32.xlu0 %v551, 1
        %v559 = vpop.permute.xlu0 %558
        %560 = vrot.lane.b32.xlu0 %v550, 1
        %v561 = vpop.permute.xlu0 %560
        %562 = vrot.lane.b32.xlu0 %v554, 1
        %v563 = vpop.permute.xlu0 %562
        %564 = vrot.lane.b32.xlu0 %v553, 1
        %v565 = vpop.permute.xlu0 %564
        %566 = vrot.lane.b32.xlu0 %v557, 1
        %v567 = vpop.permute.xlu0 %566
        %568 = vrot.lane.b32.xlu0 %v556, 1
        %v569 = vpop.permute.xlu0 %568
        %v576 = vadd.f32 %v536, %v559
        %v577 = vadd.f32 %v537, %v561
        %v578 = vadd.f32 %v538, %v563
        %v579 = vadd.f32 %v539, %v565
        %v580 = vadd.f32 %v540, %v567
        %v581 = vadd.f32 %v541, %v569
        %582 = vrot.lane.b32.xlu0 %v551, 127
        %v583 = vpop.permute.xlu0 %582
        %584 = vrot.lane.b32.xlu0 %v550, 127
        %v585 = vpop.permute.xlu0 %584
        %586 = vrot.lane.b32.xlu0 %v554, 127
        %v587 = vpop.permute.xlu0 %586
        %588 = vrot.lane.b32.xlu0 %v553, 127
        %v589 = vpop.permute.xlu0 %588
        %590 = vrot.lane.b32.xlu0 %v557, 127
        %v591 = vpop.permute.xlu0 %590
        %592 = vrot.lane.b32.xlu0 %v556, 127
        %v593 = vpop.permute.xlu0 %592
        %v600 = vadd.f32 %v576, %v583
        %v601 = vadd.f32 %v577, %v585
        %v602 = vadd.f32 %v578, %v587
        %v603 = vadd.f32 %v579, %v589
        %v604 = vadd.f32 %v580, %v591
        %v605 = vadd.f32 %v581, %v593
        %vm606 = vcmask 1045504
        %v607 = vrot.slane %v536, 2
        %v608 = vrot.slane %v537, 2
        %v609 = vsel %vm606, %v607, %v608
        %v610 = vrot.slane %v538, 2
        %v611 = vrot.slane %v539, 2
        %v612 = vsel %vm606, %v610, %v611
        %v613 = vrot.slane %v540, 2
        %v614 = vrot.slane %v541, 2
        %v615 = vsel %vm606, %v613, %v614
        %v622 = vadd.f32 %v600, %v609
        %v623 = vadd.f32 %v601, %v608
        %v624 = vadd.f32 %v602, %v612
        %v625 = vadd.f32 %v603, %v611
        %v626 = vadd.f32 %v604, %v615
        %v627 = vadd.f32 %v605, %v614
        %v629 = vrot.slane %v298, 7
        %630 = vrot.lane.b32.xlu0 %v629, 2
        %v631 = vpop.permute.xlu0 %630
        %v633 = vmul.f32 %v622, %v631
        %v634 = vmul.f32 %v623, %v631
        %v635 = vmul.f32 %v624, %v631
        %v636 = vmul.f32 %v625, %v631
        %v637 = vmul.f32 %v626, %v631
        %v638 = vmul.f32 %v627, %v631
        %vm645 = vcmask 1040384
        %v646 = vrot.slane %v633, 7
        %v647 = vrot.slane %v634, 7
        %v648 = vsel %vm645, %v646, %v647
        %v649 = vrot.slane %v635, 7
        %v650 = vrot.slane %v636, 7
        %v651 = vsel %vm645, %v649, %v650
        %v652 = vrot.slane %v637, 7
        %v653 = vrot.slane %v638, 7
        %v654 = vsel %vm645, %v652, %v653
        %v661 = vadd.f32 %v536, %v646
        %v662 = vadd.f32 %v537, %v648
        %v663 = vadd.f32 %v538, %v649
        %v664 = vadd.f32 %v539, %v651
        %v665 = vadd.f32 %v540, %v652
        %v666 = vadd.f32 %v541, %v654
        %667 = vrot.lane.b32.xlu0 %v536, 126
        %v668 = vpop.permute.xlu0 %667
        %669 = vrot.lane.b32.xlu0 %v537, 126
        %v670 = vpop.permute.xlu0 %669
        %671 = vrot.lane.b32.xlu0 %v538, 126
        %v672 = vpop.permute.xlu0 %671
        %673 = vrot.lane.b32.xlu0 %v539, 126
        %v674 = vpop.permute.xlu0 %673
        %675 = vrot.lane.b32.xlu0 %v540, 126
        %v676 = vpop.permute.xlu0 %675
        %677 = vrot.lane.b32.xlu0 %v541, 126
        %v678 = vpop.permute.xlu0 %677
        %v685 = vadd.f32 %v536, %v668
        %v686 = vadd.f32 %v537, %v670
        %v687 = vadd.f32 %v538, %v672
        %v688 = vadd.f32 %v539, %v674
        %v689 = vadd.f32 %v540, %v676
        %v690 = vadd.f32 %v541, %v678
        %v691 = vadd.f32 %v685, %v609
        %v692 = vadd.f32 %v686, %v608
        %v693 = vadd.f32 %v687, %v612
        %v694 = vadd.f32 %v688, %v611
        %v695 = vadd.f32 %v689, %v615
        %v696 = vadd.f32 %v690, %v614
        %697 = vrot.lane.b32.xlu0 %v609, 126
        %v698 = vpop.permute.xlu0 %697
        %699 = vrot.lane.b32.xlu0 %v608, 126
        %v700 = vpop.permute.xlu0 %699
        %701 = vrot.lane.b32.xlu0 %v612, 126
        %v702 = vpop.permute.xlu0 %701
        %703 = vrot.lane.b32.xlu0 %v611, 126
        %v704 = vpop.permute.xlu0 %703
        %705 = vrot.lane.b32.xlu0 %v615, 126
        %v706 = vpop.permute.xlu0 %705
        %707 = vrot.lane.b32.xlu0 %v614, 126
        %v708 = vpop.permute.xlu0 %707
        %v715 = vadd.f32 %v691, %v698
        %v716 = vadd.f32 %v692, %v700
        %v717 = vadd.f32 %v693, %v702
        %v718 = vadd.f32 %v694, %v704
        %v719 = vadd.f32 %v695, %v706
        %v720 = vadd.f32 %v696, %v708
        %v722 = vrot.slane %v301, 7
        %723 = vrot.lane.b32.xlu0 %v722, 1
        %v724 = vpop.permute.xlu0 %723
        %v726 = vmul.f32 %v715, %v724
        %v727 = vmul.f32 %v716, %v724
        %v728 = vmul.f32 %v717, %v724
        %v729 = vmul.f32 %v718, %v724
        %v730 = vmul.f32 %v719, %v724
        %v731 = vmul.f32 %v720, %v724
        %v738 = vrot.slane %v726, 7
        %v739 = vrot.slane %v727, 7
        %v740 = vsel %vm645, %v738, %v739
        %v741 = vrot.slane %v728, 7
        %v742 = vrot.slane %v729, 7
        %v743 = vsel %vm645, %v741, %v742
        %v744 = vrot.slane %v730, 7
        %v745 = vrot.slane %v731, 7
        %v746 = vsel %vm645, %v744, %v745
        %747 = vrot.lane.b32.xlu0 %v738, 1
        %v748 = vpop.permute.xlu0 %747
        %749 = vrot.lane.b32.xlu0 %v740, 1
        %v750 = vpop.permute.xlu0 %749
        %751 = vrot.lane.b32.xlu0 %v741, 1
        %v752 = vpop.permute.xlu0 %751
        %753 = vrot.lane.b32.xlu0 %v743, 1
        %v754 = vpop.permute.xlu0 %753
        %755 = vrot.lane.b32.xlu0 %v744, 1
        %v756 = vpop.permute.xlu0 %755
        %757 = vrot.lane.b32.xlu0 %v746, 1
        %v758 = vpop.permute.xlu0 %757
        %v765 = vadd.f32 %v661, %v748
        %v766 = vadd.f32 %v662, %v750
        %v767 = vadd.f32 %v663, %v752
        %v768 = vadd.f32 %v664, %v754
        %v769 = vadd.f32 %v665, %v756
        %v770 = vadd.f32 %v666, %v758
        %771 = vrot.lane.b32.xlu0 %v609, 2
        %v772 = vpop.permute.xlu0 %771
        %773 = vrot.lane.b32.xlu0 %v612, 2
        %v774 = vpop.permute.xlu0 %773
        %775 = vrot.lane.b32.xlu0 %v615, 2
        %v776 = vpop.permute.xlu0 %775
        %v780 = vadd.f32 %v536, %v772
        %v781 = vadd.f32 %v538, %v774
        %v782 = vadd.f32 %v540, %v776
        %v783 = vadd.f32 %v780, %v698
        %v784 = vadd.f32 %v781, %v702
        %v785 = vadd.f32 %v782, %v706
        %vm786 = vcmask 1043456
        %v787 = vrot.slane %v536, 4
        %v788 = vrot.slane %v537, 4
        %v789 = vsel %vm786, %v787, %v788
        %v790 = vrot.slane %v538, 4
        %v791 = vrot.slane %v539, 4
        %v792 = vsel %vm786, %v790, %v791
        %v793 = vrot.slane %v540, 4
        %v794 = vrot.slane %v541, 4
        %v795 = vsel %vm786, %v793, %v794
        %v799 = vadd.f32 %v783, %v789
        %v800 = vadd.f32 %v784, %v792
        %v801 = vadd.f32 %v785, %v795
        %803 = vrot.lane.b32.xlu0 %v304, 2
        %v804 = vpop.permute.xlu0 %803
        %v806 = vmul.f32 %v799, %v804
        %v807 = vmul.f32 %v800, %v804
        %v808 = vmul.f32 %v801, %v804
        %v812 = vrot.slane %v806, 6
        %v813 = vrot.slane %v807, 6
        %v814 = vrot.slane %v808, 6
        %v818 = vadd.f32 %v765, %v812
        %v819 = vadd.f32 %v766, %v812
        %v820 = vadd.f32 %v767, %v813
        %v821 = vadd.f32 %v768, %v813
        %v822 = vadd.f32 %v769, %v814
        %v823 = vadd.f32 %v770, %v814
        %v824 = vadd.f32 %v685, %v559
        %v825 = vadd.f32 %v687, %v563
        %v826 = vadd.f32 %v689, %v567
        %827 = vrot.lane.b32.xlu0 %v551, 125
        %v828 = vpop.permute.xlu0 %827
        %829 = vrot.lane.b32.xlu0 %v554, 125
        %v830 = vpop.permute.xlu0 %829
        %831 = vrot.lane.b32.xlu0 %v557, 125
        %v832 = vpop.permute.xlu0 %831
        %v836 = vadd.f32 %v824, %v828
        %v837 = vadd.f32 %v825, %v830
        %v838 = vadd.f32 %v826, %v832
        %vm839 = vcmask 1044480
        %v840 = vrot.slane %v536, 3
        %v841 = vrot.slane %v537, 3
        %v842 = vsel %vm839, %v840, %v841
        %v843 = vrot.slane %v538, 3
        %v844 = vrot.slane %v539, 3
        %v845 = vsel %vm839, %v843, %v844
        %v846 = vrot.slane %v540, 3
        %v847 = vrot.slane %v541, 3
        %v848 = vsel %vm839, %v846, %v847
        %849 = vrot.lane.b32.xlu0 %v842, 1
        %v850 = vpop.permute.xlu0 %849
        %851 = vrot.lane.b32.xlu0 %v845, 1
        %v852 = vpop.permute.xlu0 %851
        %853 = vrot.lane.b32.xlu0 %v848, 1
        %v854 = vpop.permute.xlu0 %853
        %v858 = vadd.f32 %v836, %v850
        %v859 = vadd.f32 %v837, %v852
        %v860 = vadd.f32 %v838, %v854
        %861 = vrot.lane.b32.xlu0 %v842, 125
        %v862 = vpop.permute.xlu0 %861
        %863 = vrot.lane.b32.xlu0 %v845, 125
        %v864 = vpop.permute.xlu0 %863
        %865 = vrot.lane.b32.xlu0 %v848, 125
        %v866 = vpop.permute.xlu0 %865
        %v870 = vadd.f32 %v858, %v862
        %v871 = vadd.f32 %v859, %v864
        %v872 = vadd.f32 %v860, %v866
        %v873 = vadd.f32 %v870, %v789
        %v874 = vadd.f32 %v871, %v792
        %v875 = vadd.f32 %v872, %v795
        %876 = vrot.lane.b32.xlu0 %v789, 126
        %v877 = vpop.permute.xlu0 %876
        %878 = vrot.lane.b32.xlu0 %v792, 126
        %v879 = vpop.permute.xlu0 %878
        %880 = vrot.lane.b32.xlu0 %v795, 126
        %v881 = vpop.permute.xlu0 %880
        %v885 = vadd.f32 %v873, %v877
        %v886 = vadd.f32 %v874, %v879
        %v887 = vadd.f32 %v875, %v881
        %889 = vrot.lane.b32.xlu0 %v308, 1
        %v890 = vpop.permute.xlu0 %889
        %v892 = vmul.f32 %v885, %v890
        %v893 = vmul.f32 %v886, %v890
        %v894 = vmul.f32 %v887, %v890
        %v898 = vrot.slane %v892, 6
        %v899 = vrot.slane %v893, 6
        %v900 = vrot.slane %v894, 6
        %901 = vrot.lane.b32.xlu0 %v898, 1
        %v902 = vpop.permute.xlu0 %901
        %903 = vrot.lane.b32.xlu0 %v899, 1
        %v904 = vpop.permute.xlu0 %903
        %905 = vrot.lane.b32.xlu0 %v900, 1
        %v906 = vpop.permute.xlu0 %905
        %v910 = vadd.f32 %v818, %v902
        %v911 = vadd.f32 %v819, %v902
        %v912 = vadd.f32 %v820, %v904
        %v913 = vadd.f32 %v821, %v904
        %v914 = vadd.f32 %v822, %v906
        %v915 = vadd.f32 %v823, %v906
        %916 = vrot.lane.b32.xlu0 %v536, 124
        %v917 = vpop.permute.xlu0 %916
        %918 = vrot.lane.b32.xlu0 %v538, 124
        %v919 = vpop.permute.xlu0 %918
        %920 = vrot.lane.b32.xlu0 %v540, 124
        %v921 = vpop.permute.xlu0 %920
        %v925 = vadd.f32 %v536, %v917
        %v926 = vadd.f32 %v538, %v919
        %v927 = vadd.f32 %v540, %v921
        %v928 = vadd.f32 %v925, %v789
        %v929 = vadd.f32 %v926, %v792
        %v930 = vadd.f32 %v927, %v795
        %931 = vrot.lane.b32.xlu0 %v789, 124
        %v932 = vpop.permute.xlu0 %931
        %933 = vrot.lane.b32.xlu0 %v792, 124
        %v934 = vpop.permute.xlu0 %933
        %935 = vrot.lane.b32.xlu0 %v795, 124
        %v936 = vpop.permute.xlu0 %935
        %v940 = vadd.f32 %v928, %v932
        %v941 = vadd.f32 %v929, %v934
        %v942 = vadd.f32 %v930, %v936
        %v943 = vmul.f32 %v940, %v311
        %v944 = vmul.f32 %v941, %v311
        %v945 = vmul.f32 %v942, %v311
        %v949 = vrot.slane %v943, 6
        %v950 = vrot.slane %v944, 6
        %v951 = vrot.slane %v945, 6
        %952 = vrot.lane.b32.xlu0 %v949, 2
        %v953 = vpop.permute.xlu0 %952
        %954 = vrot.lane.b32.xlu0 %v950, 2
        %v955 = vpop.permute.xlu0 %954
        %956 = vrot.lane.b32.xlu0 %v951, 2
        %v957 = vpop.permute.xlu0 %956
        %v961 = vadd.f32 %v910, %v953
        %v962 = vadd.f32 %v911, %v953
        %v963 = vadd.f32 %v912, %v955
        %v964 = vadd.f32 %v913, %v955
        %v965 = vadd.f32 %v914, %v957
        %v966 = vadd.f32 %v915, %v957
        %v968 = vrot.slane %v327, 6
        %969 = vrot.lane.b32.xlu0 %v968, 2
        %v970 = vpop.permute.xlu0 %969
        %v972 = vmul.f32 %v961, %v970
        %v973 = vmul.f32 %v962, %v970
        %v974 = vmul.f32 %v963, %v970
        %v975 = vmul.f32 %v964, %v970
        %v976 = vmul.f32 %v965, %v970
        %v977 = vmul.f32 %v966, %v970
        %984 = vrot.lane.b32.xlu0 %v972, 126
        %v985 = vpop.permute.xlu0 %984
        %986 = vrot.lane.b32.xlu0 %v973, 126
        %v987 = vpop.permute.xlu0 %986
        %988 = vrot.lane.b32.xlu0 %v974, 126
        %v989 = vpop.permute.xlu0 %988
        %990 = vrot.lane.b32.xlu0 %v975, 126
        %v991 = vpop.permute.xlu0 %990
        %992 = vrot.lane.b32.xlu0 %v976, 126
        %v993 = vpop.permute.xlu0 %992
        %994 = vrot.lane.b32.xlu0 %v977, 126
        %v995 = vpop.permute.xlu0 %994
        %vm1002 = vcmask 130050
        %1003 = vst.msk [vmem:[%s293 - $0x2] sm:$0xfc] %vm1002, %v985
        %vm1004 = vcmask 123904
        %1005 = vst.msk [vmem:[%s293 + $0x6] sm:$0x3] %vm1004, %v987
        %1006 = vst.msk [vmem:[%s293 + $0x6] sm:$0xfc] %vm1002, %v989
        %1007 = vst.msk [vmem:[%s293 + $0xe] sm:$0x3] %vm1004, %v991
        %1008 = vst.msk [vmem:[%s293 + $0xe] sm:$0xfc] %vm1002, %v993
        %1009 = vst.msk [vmem:[%s293 + $0x16] sm:$0x3] %vm1004, %v995
        %s1010 = sand.u32 %s129, 1
        %s1011 = scalar_lea.sflag [#allocation5], %s1010
        %s1012 = sand.u32 %s129, 1
        %s1013 = smul.addr %s1012, 24
        %s1014 = scalar_lea.vmem [#allocation9], %s1013
        // Predicated region
        $region45: #{tpu_custom_call.1} parent=31 // pred_check
          %p1015 = pneg %p139
        $region46: #{tpu_custom_call.1} parent=31 // pred_check_branch
          %1017 = sbr.rel (%p1015) target = $region48
        $region47: #{tpu_custom_call.1} parent=31 // pred_region
          %1019 = vsyncadd %s1011, 0
          %s1020 = smul.addr %s27, 6
          %s1021 = sadd.s32 %s28, %s1020
          %s1022 = smul.addr %s1021, 8
          %s1023 = scalar_lea.hbm %s3, %s1022
          %s1024 = sshll.u32 %s1014, 4
          %s1025 = int_to_ptr.vmem [resolvable:$true] %s1024
          %s1026 = sshll.u32 %s1023, 4
          %s1027 = int_to_ptr.hbm [resolvable:$true] %s1026
          %1032 = dma.vmem_to_hbm [thread:$0]  %s1025, 384, %s1027, %s1011, 128, 256, 8
        $region48: #{tpu_custom_call.1} parent=31 // pred_fallthru
          _
      $region32: #{tpu_custom_call.1} parent=5 // pred_fallthru
        _
      %p1033 = scmp.le.s32.totalorder 2, %s18
      // Predicated region
      $region49: #{tpu_custom_call.1} parent=5 // pred_check
        %p1034 = pneg %p1033
      $region50: #{tpu_custom_call.1} parent=5 // pred_check_branch
        %1036 = sbr.rel (%p1034) target = $region52
      $region51: #{tpu_custom_call.1} parent=5 // pred_region
        %s1037 = ssub.s32 %s18, 2
        // Predicated region
        $region53: #{tpu_custom_call.1} parent=51 // pred_check
          %p1038 = pneg %p145
        $region54: #{tpu_custom_call.1} parent=51 // pred_check_branch
          %1040 = sbr.rel (%p1038) target = $region56
        $region55: #{tpu_custom_call.1} parent=51 // pred_region
          %s1041 = sand.u32 %s130, 1
          %s1042 = scalar_lea.sflag [#allocation5], %s1041
          %s1043 = sand.u32 %s130, 1
          %s1044 = smul.addr %s1043, 24
          %s1045 = scalar_lea.vmem [#allocation9], %s1044
          %1047 = dma.done %s1042, 384
        $region56: #{tpu_custom_call.1} parent=51 // pred_fallthru
          _
      $region52: #{tpu_custom_call.1} parent=5 // pred_fallthru
        _
    $region6: #{tpu_custom_call.1} parent=1 // loop_footer
      %s22 = sadd.s32 1, %s18
    $region7: #{tpu_custom_call.1} parent=1 // loop_footer_branch
      %17 = sbr.rel target = $region3
    $region8: #{tpu_custom_call.1} parent=1 // loop_exit
      _
    %1048 = vsyncpa [#allocation4], 1
    %s1049 = scalar_lea.sflag [#allocation4], 1
    %1050 = vsyncpa %s1049, 1
    %1051 = vsyncpa [#allocation7], 1
    %s1052 = scalar_lea.sflag [#allocation7], 1
    %1053 = vsyncpa %s1052, 1
    %1054 = vsyncpa [#allocation5], 1
    %s1055 = scalar_lea.sflag [#allocation5], 1
    %1056 = vsyncpa %s1055, 1

</llo_original>
